<compile_context>
chip_gen: v6e
topology: v6e:2x2x1
jax: 0.10.0
libtpu: 0.0.40
codegen_flags: <defaults>
</compile_context>

<pallas_src>
import functools

import jax
import jax.numpy as jnp
from jax.experimental import pallas as pl
from jax.experimental.pallas import tpu as pltpu

LANE = 128
SUBLANE = 8


def _round_up(n, m):
    return (n + m - 1) // m * m


def _chip_info():
    """Returns (tensorcores_per_chip, physical_vmem_bytes_per_core)."""
    try:
        kind = jax.devices()[0].device_kind.lower()
    except Exception:
        kind = ""
    if "v7" in kind or "7x" in kind:
        return 2, 64 << 20           # v7x: 2 TCs/chip, 64 MiB VMEM per TC
    return 1, 128 << 20              # v5e/v6e: 1 TC/chip, 128 MiB VMEM


def sdae_kernel(x_ref,
                w1_ref, b1_ref, w2_ref, b2_ref, w3_ref, b3_ref,
                w4_ref, b4_ref, w5_ref, b5_ref, w6_ref, b6_ref,
                latent_ref, out_ref):
    def layer(h, w_ref, b_ref, relu=True):
        # bf16 operands feed the MXU; accumulate + bias + ReLU in f32 on the VPU.
        y = jnp.dot(h.astype(jnp.bfloat16), w_ref[...],
                    preferred_element_type=jnp.float32) + b_ref[...]
        return jnp.maximum(y, 0.0) if relu else y

    h = layer(x_ref[...], w1_ref, b1_ref)          # enc1 + ReLU
    h = layer(h, w2_ref, b2_ref)                   # enc2 + ReLU
    lat = layer(h, w3_ref, b3_ref)                 # enc3 + ReLU -> latent
    # Store latent right away: frees its vregs before the decoder matmuls and
    # lets the latent writeback DMA overlap the remaining compute.
    latent_ref[...] = lat.astype(latent_ref.dtype)
    d = layer(lat, w4_ref, b4_ref)                 # dec1 + ReLU
    d = layer(d, w5_ref, b5_ref)                   # dec2 + ReLU
    out_ref[...] = layer(d, w6_ref, b6_ref, relu=False).astype(out_ref.dtype)  # dec3


def _layer_dims(in_p, hid_p, emb_p):
    return {
        "1": (in_p, hid_p), "2": (hid_p, hid_p), "3": (hid_p, emb_p),
        "4": (emb_p, hid_p), "5": (hid_p, hid_p), "6": (hid_p, in_p),
    }


def prepare_padded_params(params):
    """One-time prep: pad every layer to 128-lane multiples, cast weights to bf16.

    Zero padding is exact (padded rows/cols and biases are zero, ReLU(0)=0),
    so real output columns are unchanged; the wrapper slices padding off.
    Call this ONCE per parameter set, not per forward.
    """
    input_dim, hidden_dim = params["w1"].shape
    embed_dim = params["w3"].shape[1]
    in_p, hid_p, emb_p = (_round_up(d, LANE)
                          for d in (input_dim, hidden_dim, embed_dim))

    def pad2(a, rows, cols, dtype):
        a = jnp.asarray(a, jnp.float32)
        pr, pc = rows - a.shape[0], cols - a.shape[1]
        if pr or pc:
            a = jnp.pad(a, ((0, pr), (0, pc)))
        return a.astype(dtype)

    tensors = {}
    for name, (din_p, dout_p) in _layer_dims(in_p, hid_p, emb_p).items():
        tensors["w" + name] = pad2(params["w" + name], din_p, dout_p, jnp.bfloat16)
        tensors["b" + name] = pad2(params["b" + name].reshape(1, -1),
                                   1, dout_p, jnp.float32)
    dims = dict(input_dim=input_dim, hidden_dim=hidden_dim, embed_dim=embed_dim,
                in_p=in_p, hid_p=hid_p, emb_p=emb_p)
    return tensors, dims


def sdae_forward(x, tensors, dims, *, tile_b=None, out_dtype=jnp.float32):
    """Pallas SDAE forward.  tensors/dims come from prepare_padded_params."""
    B, input_dim = x.shape
    assert input_dim == dims["input_dim"]
    in_p, hid_p, emb_p = dims["in_p"], dims["hid_p"], dims["emb_p"]
    embed_dim = dims["embed_dim"]

    num_tc, phys_vmem = _chip_info()
    vmem_clamp = (56 << 20) if phys_vmem <= (64 << 20) else (100 << 20)

    out_itemsize = jnp.dtype(out_dtype).itemsize
    weight_bytes = sum(int(t.size) * t.dtype.itemsize for t in tensors.values())

    # Only pad the batch to the 8-row sublane boundary.  A ragged last grid
    # block is fine: every op is row-independent, OOB rows are write-masked by
    # Pallas, and padded rows are sliced off below.
    B8 = _round_up(B, SUBLANE)

    if tile_b is None:
        # VMEM bytes per batch row with double-buffered pipelined tiles
        # (weights use constant index_maps -> one single-buffered copy).
        per_row = 2 * (in_p * 2 + (emb_p + in_p) * out_itemsize)
        headroom = vmem_clamp - weight_bytes - (8 << 20)
        cap = max(SUBLANE, min(512, (headroom // per_row) // SUBLANE * SUBLANE))
        if num_tc >= 2 and B8 > SUBLANE:
            # 2-TC chip: ensure >= 2 grid steps so the 'parallel' batch axis
            # shards across both TensorCores.
            tile_b = min(cap, _round_up(pl.cdiv(B8, 2), SUBLANE))
        else:
            tile_b = min(cap, B8)
    tile_b = max(SUBLANE, _round_up(tile_b, SUBLANE))
    grid = (pl.cdiv(B8, tile_b),)

    # Pad x (batch to 8, features to 128 lanes) and pre-cast to bf16 -- the
    # kernel would round to bf16 before the first matmul anyway, so this is
    # bit-identical and halves the input DMA bytes / VMEM tile.
    pr, pc = B8 - B, in_p - input_dim
    x_p = jnp.asarray(x, jnp.float32)
    if pr or pc:
        x_p = jnp.pad(x_p, ((0, pr), (0, pc)))
    x_p = x_p.astype(jnp.bfloat16)

    layer_dims = _layer_dims(in_p, hid_p, emb_p)
    operands = [x_p]
    in_specs = [pl.BlockSpec((tile_b, in_p), lambda i: (i, 0))]
    for name, (din_p, dout_p) in layer_dims.items():
        operands += [tensors["w" + name], tensors["b" + name]]
        # Constant index_map: one resident copy per weight, reused every step.
        in_specs += [pl.BlockSpec((din_p, dout_p), lambda i: (0, 0)),
                     pl.BlockSpec((1, dout_p), lambda i: (0, 0))]

    out_specs = [
        pl.BlockSpec((tile_b, emb_p), lambda i: (i, 0)),
        pl.BlockSpec((tile_b, in_p), lambda i: (i, 0)),
    ]
    out_shape = (
        jax.ShapeDtypeStruct((B8, emb_p), out_dtype),
        jax.ShapeDtypeStruct((B8, in_p), out_dtype),
    )

    # Advisory cost estimate over the padded shapes.
    flops = 2 * B8 * sum(d0 * d1 for d0, d1 in layer_dims.values())
    bytes_accessed = (int(x_p.size) * 2 + weight_bytes
                      + B8 * (emb_p + in_p) * out_itemsize)
    cost = pl.CostEstimate(flops=flops, transcendentals=0,
                           bytes_accessed=bytes_accessed)

    # VMEM budget: double-buffered batch tiles + ONE copy of the resident
    # weights + compiler-scratch slack, clamped per chip generation.
    tile_bytes = tile_b * in_p * 2 + tile_b * (emb_p + in_p) * out_itemsize
    vmem_limit = weight_bytes + 2 * tile_bytes + (8 << 20)
    vmem_limit = min(max(vmem_limit, 16 << 20), vmem_clamp)

    grid_spec = pltpu.PrefetchScalarGridSpec(
        num_scalar_prefetch=0,
        grid=grid,
        in_specs=in_specs,
        out_specs=out_specs,
    )

    latent_p, recon_p = pl.pallas_call(
        sdae_kernel,
        grid_spec=grid_spec,
        out_shape=out_shape,
        compiler_params=pltpu.CompilerParams(
            dimension_semantics=("parallel",),
            vmem_limit_bytes=vmem_limit,
        ),
        cost_estimate=cost,
    )(*operands)

    # Slice lane / batch padding back off.
    return latent_p[:B, :embed_dim], recon_p[:B, :input_dim]


def init_params(key, input_dim, hidden_dim, embed_dim):
    """Deterministic init mimicking PyTorch nn.Linear default U(-1/sqrt(in), 1/sqrt(in))."""
    dims = [
        ("1", input_dim, hidden_dim),   # enc1
        ("2", hidden_dim, hidden_dim),  # enc2
        ("3", hidden_dim, embed_dim),   # enc3
        ("4", embed_dim, hidden_dim),   # dec1
        ("5", hidden_dim, hidden_dim),  # dec2
        ("6", hidden_dim, input_dim),   # dec3
    ]
    params = {}
    for name, din, dout in dims:
        key, kw, kb = jax.random.split(key, 3)
        bound = 1.0 / jnp.sqrt(jnp.float32(din))
        params["w" + name] = jax.random.uniform(
            kw, (din, dout), jnp.float32, -bound, bound)   # stored (in, out)
        params["b" + name] = jax.random.uniform(
            kb, (1, dout), jnp.float32, -bound, bound)
    return params


def sdae_reference_f32(x, params):
    """Pure-JAX f32 reference (exact module semantics)."""
    h = jax.nn.relu(x @ params["w1"] + params["b1"])
    h = jax.nn.relu(h @ params["w2"] + params["b2"])
    lat = jax.nn.relu(h @ params["w3"] + params["b3"])
    d = jax.nn.relu(lat @ params["w4"] + params["b4"])
    d = jax.nn.relu(d @ params["w5"] + params["b5"])
    rec = d @ params["w6"] + params["b6"]
    return lat, rec


def sdae_reference_bf16(x, params):
    """Reference with the same bf16-matmul / f32-accumulate recipe as the kernel."""
    def layer(h, w, b, relu=True):
        y = jnp.dot(h.astype(jnp.bfloat16), w.astype(jnp.bfloat16),
                    preferred_element_type=jnp.float32) + b
        return jnp.maximum(y, 0.0) if relu else y
    h = layer(x, params["w1"], params["b1"])
    h = layer(h, params["w2"], params["b2"])
    lat = layer(h, params["w3"], params["b3"])
    d = layer(lat, params["w4"], params["b4"])
    d = layer(d, params["w5"], params["b5"])
    rec = layer(d, params["w6"], params["b6"], relu=False)
    return lat, rec


if __name__ == "__main__":
    input_dim, hidden_dim, embed_dim = 128, 64, 32
    B = 16

    key = jax.random.PRNGKey(0)
    kx, kp = jax.random.split(key)
    x = jax.random.normal(kx, (B, input_dim), jnp.float32)
    params = init_params(kp, input_dim, hidden_dim, embed_dim)

    # One-time parameter prep (padding + bf16 cast) outside the per-call path.
    tensors, dims = prepare_padded_params(params)
    tensors = jax.tree_util.tree_map(jax.block_until_ready, tensors)

    fwd = jax.jit(functools.partial(sdae_forward, dims=dims))
    latent, recon = fwd(x, tensors)
    latent = jax.block_until_ready(latent)
    recon = jax.block_until_ready(recon)

    assert latent.shape == (B, embed_dim) and recon.shape == (B, input_dim)

    # Tight check against a reference using the same bf16-matmul recipe.
    lat_bf, rec_bf = sdae_reference_bf16(x, params)
    assert jnp.allclose(latent, lat_bf, atol=2e-3, rtol=2e-3)
    assert jnp.allclose(recon, rec_bf, atol=2e-3, rtol=2e-3)

    # Loose check against the pure-f32 module semantics (bf16 operand rounding).
    # TODO(synk): if exact f32 semantics are required, swap bf16 operands for f32.
    lat_f32, rec_f32 = sdae_reference_f32(x, params)
    assert jnp.allclose(latent, lat_f32, atol=6e-2, rtol=6e-2)
    assert jnp.allclose(recon, rec_f32, atol=6e-2, rtol=6e-2)

    print("KERNEL_OK")
</pallas_src>

<mosaic_0001>
module attributes {stable_mosaic.version = 11 : i64} {
  func.func @sdae_kernel(%arg0: i32, %arg1: memref<16x128xbf16, #tpu.memory_space<vmem>>, %arg2: memref<128x128xbf16, #tpu.memory_space<vmem>>, %arg3: memref<1x128xf32, #tpu.memory_space<vmem>>, %arg4: memref<128x128xbf16, #tpu.memory_space<vmem>>, %arg5: memref<1x128xf32, #tpu.memory_space<vmem>>, %arg6: memref<128x128xbf16, #tpu.memory_space<vmem>>, %arg7: memref<1x128xf32, #tpu.memory_space<vmem>>, %arg8: memref<128x128xbf16, #tpu.memory_space<vmem>>, %arg9: memref<1x128xf32, #tpu.memory_space<vmem>>, %arg10: memref<128x128xbf16, #tpu.memory_space<vmem>>, %arg11: memref<1x128xf32, #tpu.memory_space<vmem>>, %arg12: memref<128x128xbf16, #tpu.memory_space<vmem>>, %arg13: memref<1x128xf32, #tpu.memory_space<vmem>>, %arg14: memref<16x128xf32, #tpu.memory_space<vmem>>, %arg15: memref<16x128xf32, #tpu.memory_space<vmem>>) attributes {dimension_semantics = [#tpu.dimension_semantics<parallel>], iteration_bounds = array<i64: 1>, scalar_prefetch = 0 : i64, scratch_operands = 0 : i64, tpu.core_type = #tpu.core_type<tc>, window_params = [{transform_indices = @transform_0, window_bounds = array<i64: 16, 128>}, {pipeline_mode = #tpu.pipeline_mode<synchronous>, transform_indices = @transform_1, window_bounds = array<i64: 128, 128>}, {pipeline_mode = #tpu.pipeline_mode<synchronous>, transform_indices = @transform_2, window_bounds = array<i64: 1, 128>}, {pipeline_mode = #tpu.pipeline_mode<synchronous>, transform_indices = @transform_3, window_bounds = array<i64: 128, 128>}, {pipeline_mode = #tpu.pipeline_mode<synchronous>, transform_indices = @transform_4, window_bounds = array<i64: 1, 128>}, {pipeline_mode = #tpu.pipeline_mode<synchronous>, transform_indices = @transform_5, window_bounds = array<i64: 128, 128>}, {pipeline_mode = #tpu.pipeline_mode<synchronous>, transform_indices = @transform_6, window_bounds = array<i64: 1, 128>}, {pipeline_mode = #tpu.pipeline_mode<synchronous>, transform_indices = @transform_7, window_bounds = array<i64: 128, 128>}, {pipeline_mode = #tpu.pipeline_mode<synchronous>, transform_indices = @transform_8, window_bounds = array<i64: 1, 128>}, {pipeline_mode = #tpu.pipeline_mode<synchronous>, transform_indices = @transform_9, window_bounds = array<i64: 128, 128>}, {pipeline_mode = #tpu.pipeline_mode<synchronous>, transform_indices = @transform_10, window_bounds = array<i64: 1, 128>}, {pipeline_mode = #tpu.pipeline_mode<synchronous>, transform_indices = @transform_11, window_bounds = array<i64: 128, 128>}, {pipeline_mode = #tpu.pipeline_mode<synchronous>, transform_indices = @transform_12, window_bounds = array<i64: 1, 128>}, {transform_indices = @transform_13, window_bounds = array<i64: 16, 128>}, {transform_indices = @transform_14, window_bounds = array<i64: 16, 128>}]} {
    %c0 = arith.constant 0 : index
    %c0_0 = arith.constant 0 : index
    %0 = vector.load %arg1[%c0, %c0_0] : memref<16x128xbf16, #tpu.memory_space<vmem>>, vector<16x128xbf16>
    %c0_1 = arith.constant 0 : index
    %c0_2 = arith.constant 0 : index
    %1 = vector.load %arg2[%c0_1, %c0_2] : memref<128x128xbf16, #tpu.memory_space<vmem>>, vector<128x128xbf16>
    %cst = arith.constant dense<0.000000e+00> : vector<16x128xf32>
    %2 = tpu.matmul %0, %1, %cst {dimension_numbers = #tpu.dot_dimension_numbers<[1], [0], [0], [1], [0, 0, 1, 1], [], []>} : vector<16x128xbf16>, vector<128x128xbf16>, vector<16x128xf32> -> vector<16x128xf32>
    %c0_3 = arith.constant 0 : index
    %c0_4 = arith.constant 0 : index
    %3 = vector.load %arg3[%c0_3, %c0_4] : memref<1x128xf32, #tpu.memory_space<vmem>>, vector<1x128xf32>
    %4 = vector.broadcast %3 : vector<1x128xf32> to vector<16x128xf32>
    %5 = arith.addf %2, %4 : vector<16x128xf32>
    %cst_5 = arith.constant 0.000000e+00 : f32
    %6 = vector.broadcast %cst_5 : f32 to vector<16x128xf32>
    %7 = arith.maximumf %5, %6 : vector<16x128xf32>
    %8 = arith.truncf %7 : vector<16x128xf32> to vector<16x128xbf16>
    %c0_6 = arith.constant 0 : index
    %c0_7 = arith.constant 0 : index
    %9 = vector.load %arg4[%c0_6, %c0_7] : memref<128x128xbf16, #tpu.memory_space<vmem>>, vector<128x128xbf16>
    %cst_8 = arith.constant dense<0.000000e+00> : vector<16x128xf32>
    %10 = tpu.matmul %8, %9, %cst_8 {dimension_numbers = #tpu.dot_dimension_numbers<[1], [0], [0], [1], [0, 0, 1, 1], [], []>} : vector<16x128xbf16>, vector<128x128xbf16>, vector<16x128xf32> -> vector<16x128xf32>
    %c0_9 = arith.constant 0 : index
    %c0_10 = arith.constant 0 : index
    %11 = vector.load %arg5[%c0_9, %c0_10] : memref<1x128xf32, #tpu.memory_space<vmem>>, vector<1x128xf32>
    %12 = vector.broadcast %11 : vector<1x128xf32> to vector<16x128xf32>
    %13 = arith.addf %10, %12 : vector<16x128xf32>
    %cst_11 = arith.constant 0.000000e+00 : f32
    %14 = vector.broadcast %cst_11 : f32 to vector<16x128xf32>
    %15 = arith.maximumf %13, %14 : vector<16x128xf32>
    %16 = arith.truncf %15 : vector<16x128xf32> to vector<16x128xbf16>
    %c0_12 = arith.constant 0 : index
    %c0_13 = arith.constant 0 : index
    %17 = vector.load %arg6[%c0_12, %c0_13] : memref<128x128xbf16, #tpu.memory_space<vmem>>, vector<128x128xbf16>
    %cst_14 = arith.constant dense<0.000000e+00> : vector<16x128xf32>
    %18 = tpu.matmul %16, %17, %cst_14 {dimension_numbers = #tpu.dot_dimension_numbers<[1], [0], [0], [1], [0, 0, 1, 1], [], []>} : vector<16x128xbf16>, vector<128x128xbf16>, vector<16x128xf32> -> vector<16x128xf32>
    %c0_15 = arith.constant 0 : index
    %c0_16 = arith.constant 0 : index
    %19 = vector.load %arg7[%c0_15, %c0_16] : memref<1x128xf32, #tpu.memory_space<vmem>>, vector<1x128xf32>
    %20 = vector.broadcast %19 : vector<1x128xf32> to vector<16x128xf32>
    %21 = arith.addf %18, %20 : vector<16x128xf32>
    %cst_17 = arith.constant 0.000000e+00 : f32
    %22 = vector.broadcast %cst_17 : f32 to vector<16x128xf32>
    %23 = arith.maximumf %21, %22 : vector<16x128xf32>
    %c0_18 = arith.constant 0 : index
    %c0_19 = arith.constant 0 : index
    %24 = vector.load %arg14[%c0_18, %c0_19] : memref<16x128xf32, #tpu.memory_space<vmem>>, vector<16x128xf32>
    tpu.vector_store %arg14[%c0_18, %c0_19], %23 {strides = array<i32>} : memref<16x128xf32, #tpu.memory_space<vmem>>, vector<16x128xf32>,
    %25 = arith.truncf %23 : vector<16x128xf32> to vector<16x128xbf16>
    %c0_20 = arith.constant 0 : index
    %c0_21 = arith.constant 0 : index
    %26 = vector.load %arg8[%c0_20, %c0_21] : memref<128x128xbf16, #tpu.memory_space<vmem>>, vector<128x128xbf16>
    %cst_22 = arith.constant dense<0.000000e+00> : vector<16x128xf32>
    %27 = tpu.matmul %25, %26, %cst_22 {dimension_numbers = #tpu.dot_dimension_numbers<[1], [0], [0], [1], [0, 0, 1, 1], [], []>} : vector<16x128xbf16>, vector<128x128xbf16>, vector<16x128xf32> -> vector<16x128xf32>
    %c0_23 = arith.constant 0 : index
    %c0_24 = arith.constant 0 : index
    %28 = vector.load %arg9[%c0_23, %c0_24] : memref<1x128xf32, #tpu.memory_space<vmem>>, vector<1x128xf32>
    %29 = vector.broadcast %28 : vector<1x128xf32> to vector<16x128xf32>
    %30 = arith.addf %27, %29 : vector<16x128xf32>
    %cst_25 = arith.constant 0.000000e+00 : f32
    %31 = vector.broadcast %cst_25 : f32 to vector<16x128xf32>
    %32 = arith.maximumf %30, %31 : vector<16x128xf32>
    %33 = arith.truncf %32 : vector<16x128xf32> to vector<16x128xbf16>
    %c0_26 = arith.constant 0 : index
    %c0_27 = arith.constant 0 : index
    %34 = vector.load %arg10[%c0_26, %c0_27] : memref<128x128xbf16, #tpu.memory_space<vmem>>, vector<128x128xbf16>
    %cst_28 = arith.constant dense<0.000000e+00> : vector<16x128xf32>
    %35 = tpu.matmul %33, %34, %cst_28 {dimension_numbers = #tpu.dot_dimension_numbers<[1], [0], [0], [1], [0, 0, 1, 1], [], []>} : vector<16x128xbf16>, vector<128x128xbf16>, vector<16x128xf32> -> vector<16x128xf32>
    %c0_29 = arith.constant 0 : index
    %c0_30 = arith.constant 0 : index
    %36 = vector.load %arg11[%c0_29, %c0_30] : memref<1x128xf32, #tpu.memory_space<vmem>>, vector<1x128xf32>
    %37 = vector.broadcast %36 : vector<1x128xf32> to vector<16x128xf32>
    %38 = arith.addf %35, %37 : vector<16x128xf32>
    %cst_31 = arith.constant 0.000000e+00 : f32
    %39 = vector.broadcast %cst_31 : f32 to vector<16x128xf32>
    %40 = arith.maximumf %38, %39 : vector<16x128xf32>
    %41 = arith.truncf %40 : vector<16x128xf32> to vector<16x128xbf16>
    %c0_32 = arith.constant 0 : index
    %c0_33 = arith.constant 0 : index
    %42 = vector.load %arg12[%c0_32, %c0_33] : memref<128x128xbf16, #tpu.memory_space<vmem>>, vector<128x128xbf16>
    %cst_34 = arith.constant dense<0.000000e+00> : vector<16x128xf32>
    %43 = tpu.matmul %41, %42, %cst_34 {dimension_numbers = #tpu.dot_dimension_numbers<[1], [0], [0], [1], [0, 0, 1, 1], [], []>} : vector<16x128xbf16>, vector<128x128xbf16>, vector<16x128xf32> -> vector<16x128xf32>
    %c0_35 = arith.constant 0 : index
    %c0_36 = arith.constant 0 : index
    %44 = vector.load %arg13[%c0_35, %c0_36] : memref<1x128xf32, #tpu.memory_space<vmem>>, vector<1x128xf32>
    %45 = vector.broadcast %44 : vector<1x128xf32> to vector<16x128xf32>
    %46 = arith.addf %43, %45 : vector<16x128xf32>
    %c0_37 = arith.constant 0 : index
    %c0_38 = arith.constant 0 : index
    %47 = vector.load %arg15[%c0_37, %c0_38] : memref<16x128xf32, #tpu.memory_space<vmem>>, vector<16x128xf32>
    tpu.vector_store %arg15[%c0_37, %c0_38], %46 {strides = array<i32>} : memref<16x128xf32, #tpu.memory_space<vmem>>, vector<16x128xf32>,
    return
  }
  func.func @transform_0(%arg0: i32) -> (i32, i32) {
    %c0_i32 = arith.constant 0 : i32
    %c0_i32_0 = arith.constant 0 : i32
    return %arg0, %c0_i32 : i32, i32
  }
  func.func @transform_1(%arg0: i32) -> (i32, i32) {
    %c0_i32 = arith.constant 0 : i32
    %c0_i32_0 = arith.constant 0 : i32
    %c0_i32_1 = arith.constant 0 : i32
    return %c0_i32, %c0_i32_0 : i32, i32
  }
  func.func @transform_2(%arg0: i32) -> (i32, i32) {
    %c0_i32 = arith.constant 0 : i32
    %c0_i32_0 = arith.constant 0 : i32
    %c0_i32_1 = arith.constant 0 : i32
    return %c0_i32, %c0_i32_0 : i32, i32
  }
  func.func @transform_3(%arg0: i32) -> (i32, i32) {
    %c0_i32 = arith.constant 0 : i32
    %c0_i32_0 = arith.constant 0 : i32
    %c0_i32_1 = arith.constant 0 : i32
    return %c0_i32, %c0_i32_0 : i32, i32
  }
  func.func @transform_4(%arg0: i32) -> (i32, i32) {
    %c0_i32 = arith.constant 0 : i32
    %c0_i32_0 = arith.constant 0 : i32
    %c0_i32_1 = arith.constant 0 : i32
    return %c0_i32, %c0_i32_0 : i32, i32
  }
  func.func @transform_5(%arg0: i32) -> (i32, i32) {
    %c0_i32 = arith.constant 0 : i32
    %c0_i32_0 = arith.constant 0 : i32
    %c0_i32_1 = arith.constant 0 : i32
    return %c0_i32, %c0_i32_0 : i32, i32
  }
  func.func @transform_6(%arg0: i32) -> (i32, i32) {
    %c0_i32 = arith.constant 0 : i32
    %c0_i32_0 = arith.constant 0 : i32
    %c0_i32_1 = arith.constant 0 : i32
    return %c0_i32, %c0_i32_0 : i32, i32
  }
  func.func @transform_7(%arg0: i32) -> (i32, i32) {
    %c0_i32 = arith.constant 0 : i32
    %c0_i32_0 = arith.constant 0 : i32
    %c0_i32_1 = arith.constant 0 : i32
    return %c0_i32, %c0_i32_0 : i32, i32
  }
  func.func @transform_8(%arg0: i32) -> (i32, i32) {
    %c0_i32 = arith.constant 0 : i32
    %c0_i32_0 = arith.constant 0 : i32
    %c0_i32_1 = arith.constant 0 : i32
    return %c0_i32, %c0_i32_0 : i32, i32
  }
  func.func @transform_9(%arg0: i32) -> (i32, i32) {
    %c0_i32 = arith.constant 0 : i32
    %c0_i32_0 = arith.constant 0 : i32
    %c0_i32_1 = arith.constant 0 : i32
    return %c0_i32, %c0_i32_0 : i32, i32
  }
  func.func @transform_10(%arg0: i32) -> (i32, i32) {
    %c0_i32 = arith.constant 0 : i32
    %c0_i32_0 = arith.constant 0 : i32
    %c0_i32_1 = arith.constant 0 : i32
    return %c0_i32, %c0_i32_0 : i32, i32
  }
  func.func @transform_11(%arg0: i32) -> (i32, i32) {
    %c0_i32 = arith.constant 0 : i32
    %c0_i32_0 = arith.constant 0 : i32
    %c0_i32_1 = arith.constant 0 : i32
    return %c0_i32, %c0_i32_0 : i32, i32
  }
  func.func @transform_12(%arg0: i32) -> (i32, i32) {
    %c0_i32 = arith.constant 0 : i32
    %c0_i32_0 = arith.constant 0 : i32
    %c0_i32_1 = arith.constant 0 : i32
    return %c0_i32, %c0_i32_0 : i32, i32
  }
  func.func @transform_13(%arg0: i32) -> (i32, i32) {
    %c0_i32 = arith.constant 0 : i32
    %c0_i32_0 = arith.constant 0 : i32
    return %arg0, %c0_i32 : i32, i32
  }
  func.func @transform_14(%arg0: i32) -> (i32, i32) {
    %c0_i32 = arith.constant 0 : i32
    %c0_i32_0 = arith.constant 0 : i32
    return %arg0, %c0_i32 : i32, i32
  }
}

</mosaic_0001>

<llo_original>
// kernel: sdae_forward.1
$region0: #{sdae_forward.1}
  #allocation0 [shape = 'u32[]', space=smem, size = 0x4, offset = 0x4, fixed_abs, tag = 'smem constant byte address 0x4 - core index']
  #allocation1 [shape = 'u32[144,128]{1,0:T(1,128)}', space=vmem, size = 0x12000, scoped, tag = 'internal scratch']
  %s0 = inlined_call_operand.vmem [shape: bf16[16,128], index: 0, kind: input, shape index: {}]
  %s1 = inlined_call_operand.hbm [shape: bf16[128,128], index: 1, kind: input, shape index: {}]
  %s2 = inlined_call_operand.vmem [shape: f32[1,128], index: 2, kind: input, shape index: {}]
  %s3 = inlined_call_operand.hbm [shape: bf16[128,128], index: 3, kind: input, shape index: {}]
  %s4 = inlined_call_operand.vmem [shape: f32[1,128], index: 4, kind: input, shape index: {}]
  %s5 = inlined_call_operand.hbm [shape: bf16[128,128], index: 5, kind: input, shape index: {}]
  %s6 = inlined_call_operand.vmem [shape: f32[1,128], index: 6, kind: input, shape index: {}]
  %s7 = inlined_call_operand.hbm [shape: bf16[128,128], index: 7, kind: input, shape index: {}]
  %s8 = inlined_call_operand.vmem [shape: f32[1,128], index: 8, kind: input, shape index: {}]
  %s9 = inlined_call_operand.hbm [shape: bf16[128,128], index: 9, kind: input, shape index: {}]
  %s10 = inlined_call_operand.vmem [shape: f32[1,128], index: 10, kind: input, shape index: {}]
  %s11 = inlined_call_operand.hbm [shape: bf16[128,128], index: 11, kind: input, shape index: {}]
  %s12 = inlined_call_operand.vmem [shape: f32[1,128], index: 12, kind: input, shape index: {}]
  %s13 = inlined_call_operand.hbm [shape: f32[16,128], index: 13, kind: output, shape index: {0}]
  %s14 = inlined_call_operand.hbm [shape: f32[16,128], index: 14, kind: output, shape index: {1}]
  %15 = xla_tuple %s13, %s14
  %s16 = sld [smem:[#allocation0]]
  $region94: #{sdae_forward.1} parent=0
    _
  %s18 = ssub.s32 1, %s16
  %s19 = scalar_select 0, %s18, %s16
  $region1: #{sdae_forward.1} parent=0
    #allocation2 [shape = 'u8[32768]{0}', space=vmem, size = 0x8000, scoped, tag = 'input window, operand 1, single buffered']
    #allocation3 [shape = 's32[1]{0}', space=sflag, size = 0x4, scoped, tag = 'scoped memory for sdae_forward.1']
    #allocation4 [shape = 's32[1]{0}', space=sflag, size = 0x4, scoped, tag = 'scoped memory for sdae_forward.1']
    #allocation5 [shape = 'u8[32768]{0}', space=vmem, size = 0x8000, scoped, tag = 'input window, operand 3, single buffered']
    #allocation6 [shape = 's32[1]{0}', space=sflag, size = 0x4, scoped, tag = 'scoped memory for sdae_forward.1']
    #allocation7 [shape = 'u8[32768]{0}', space=vmem, size = 0x8000, scoped, tag = 'input window, operand 5, single buffered']
    #allocation8 [shape = 'u8[32768]{0}', space=vmem, size = 0x8000, scoped, tag = 'input window, operand 7, single buffered']
    #allocation9 [shape = 's32[1]{0}', space=sflag, size = 0x4, scoped, tag = 'scoped memory for sdae_forward.1']
    #allocation10 [shape = 'u8[32768]{0}', space=vmem, size = 0x8000, scoped, tag = 'input window, operand 9, single buffered']
    #allocation11 [shape = 'u8[32768]{0}', space=vmem, size = 0x8000, scoped, tag = 'input window, operand 11, single buffered']
    #allocation12 [shape = 's32[1]{0}', space=sflag, size = 0x4, scoped, tag = 'scoped memory for sdae_forward.1']
    #allocation13 [shape = 'u8[8192]{0}', space=vmem, size = 0x2000, scoped, tag = 'output window, operand 0, single buffered']
    #allocation14 [shape = 'u8[8192]{0}', space=vmem, size = 0x2000, scoped, tag = 'output window, operand 1, single buffered']
    #allocation15 [shape = 's32[1]{0}', space=sflag, size = 0x4, scoped, tag = 'scoped memory for sdae_forward.1']
    %20 = vsyncpa [#allocation3], 0
    %21 = vsyncpa [#allocation6], 0
    %22 = vsyncpa [#allocation9], 0
    %23 = vsyncpa [#allocation12], 0
    %24 = vsyncpa [#allocation4], 0
    %25 = vsyncpa [#allocation15], 0
    // Predicated region
    $region2: #{sdae_forward.1} parent=1 // pred_check
      _
    $region3: #{sdae_forward.1} parent=1 // pred_check_branch
      %27 = sbr.rel (0) target = $region5
    $region4: #{sdae_forward.1} parent=1 // pred_region
      _
    $region5: #{sdae_forward.1} parent=1 // pred_fallthru
      _
    // Predicated region
    $region6: #{sdae_forward.1} parent=1 // pred_check
      _
    $region7: #{sdae_forward.1} parent=1 // pred_check_branch
      %29 = sbr.rel (0) target = $region9
    $region8: #{sdae_forward.1} parent=1 // pred_region
      %s31 = ssub.s32 1024, 1024
      %32 = vsyncadd [#allocation3], %s31
      %s33 = sshll.u32 [#allocation2], 4
      %s34 = int_to_ptr.vmem [resolvable:$true] %s33
      %39 = dma.hbm_to_vmem [thread:$0]  %s1, 1024, %s34, [#allocation3], 64, 64, 4
    $region9: #{sdae_forward.1} parent=1 // pred_fallthru
      _
    // Predicated region
    $region10: #{sdae_forward.1} parent=1 // pred_check
      _
    $region11: #{sdae_forward.1} parent=1 // pred_check_branch
      %41 = sbr.rel (0) target = $region13
    $region12: #{sdae_forward.1} parent=1 // pred_region
      _
    $region13: #{sdae_forward.1} parent=1 // pred_fallthru
      _
    // Predicated region
    $region14: #{sdae_forward.1} parent=1 // pred_check
      _
    $region15: #{sdae_forward.1} parent=1 // pred_check_branch
      %43 = sbr.rel (0) target = $region17
    $region16: #{sdae_forward.1} parent=1 // pred_region
      %s45 = ssub.s32 1024, 1024
      %46 = vsyncadd [#allocation6], %s45
      %s47 = sshll.u32 [#allocation5], 4
      %s48 = int_to_ptr.vmem [resolvable:$true] %s47
      %53 = dma.hbm_to_vmem [thread:$0]  %s3, 1024, %s48, [#allocation6], 64, 64, 4
    $region17: #{sdae_forward.1} parent=1 // pred_fallthru
      _
    // Predicated region
    $region18: #{sdae_forward.1} parent=1 // pred_check
      _
    $region19: #{sdae_forward.1} parent=1 // pred_check_branch
      %55 = sbr.rel (0) target = $region21
    $region20: #{sdae_forward.1} parent=1 // pred_region
      _
    $region21: #{sdae_forward.1} parent=1 // pred_fallthru
      _
    // Predicated region
    $region22: #{sdae_forward.1} parent=1 // pred_check
      _
    $region23: #{sdae_forward.1} parent=1 // pred_check_branch
      %57 = sbr.rel (0) target = $region25
    $region24: #{sdae_forward.1} parent=1 // pred_region
      %s59 = ssub.s32 1024, 1024
      %60 = vsyncadd [#allocation6], %s59
      %s61 = sshll.u32 [#allocation7], 4
      %s62 = int_to_ptr.vmem [resolvable:$true] %s61
      %67 = dma.hbm_to_vmem [thread:$0]  %s5, 1024, %s62, [#allocation6], 64, 64, 4
    $region25: #{sdae_forward.1} parent=1 // pred_fallthru
      _
    // Predicated region
    $region26: #{sdae_forward.1} parent=1 // pred_check
      _
    $region27: #{sdae_forward.1} parent=1 // pred_check_branch
      %69 = sbr.rel (0) target = $region29
    $region28: #{sdae_forward.1} parent=1 // pred_region
      _
    $region29: #{sdae_forward.1} parent=1 // pred_fallthru
      _
    // Predicated region
    $region30: #{sdae_forward.1} parent=1 // pred_check
      _
    $region31: #{sdae_forward.1} parent=1 // pred_check_branch
      %71 = sbr.rel (0) target = $region33
    $region32: #{sdae_forward.1} parent=1 // pred_region
      %s73 = ssub.s32 1024, 1024
      %74 = vsyncadd [#allocation9], %s73
      %s75 = sshll.u32 [#allocation8], 4
      %s76 = int_to_ptr.vmem [resolvable:$true] %s75
      %81 = dma.hbm_to_vmem [thread:$0]  %s7, 1024, %s76, [#allocation9], 64, 64, 4
    $region33: #{sdae_forward.1} parent=1 // pred_fallthru
      _
    // Predicated region
    $region34: #{sdae_forward.1} parent=1 // pred_check
      _
    $region35: #{sdae_forward.1} parent=1 // pred_check_branch
      %83 = sbr.rel (0) target = $region37
    $region36: #{sdae_forward.1} parent=1 // pred_region
      _
    $region37: #{sdae_forward.1} parent=1 // pred_fallthru
      _
    // Predicated region
    $region38: #{sdae_forward.1} parent=1 // pred_check
      _
    $region39: #{sdae_forward.1} parent=1 // pred_check_branch
      %85 = sbr.rel (0) target = $region41
    $region40: #{sdae_forward.1} parent=1 // pred_region
      %s87 = ssub.s32 1024, 1024
      %88 = vsyncadd [#allocation9], %s87
      %s89 = sshll.u32 [#allocation10], 4
      %s90 = int_to_ptr.vmem [resolvable:$true] %s89
      %95 = dma.hbm_to_vmem [thread:$0]  %s9, 1024, %s90, [#allocation9], 64, 64, 4
    $region41: #{sdae_forward.1} parent=1 // pred_fallthru
      _
    // Predicated region
    $region42: #{sdae_forward.1} parent=1 // pred_check
      _
    $region43: #{sdae_forward.1} parent=1 // pred_check_branch
      %97 = sbr.rel (0) target = $region45
    $region44: #{sdae_forward.1} parent=1 // pred_region
      _
    $region45: #{sdae_forward.1} parent=1 // pred_fallthru
      _
    // Predicated region
    $region46: #{sdae_forward.1} parent=1 // pred_check
      _
    $region47: #{sdae_forward.1} parent=1 // pred_check_branch
      %99 = sbr.rel (0) target = $region49
    $region48: #{sdae_forward.1} parent=1 // pred_region
      %s101 = ssub.s32 1024, 1024
      %102 = vsyncadd [#allocation12], %s101
      %s103 = sshll.u32 [#allocation11], 4
      %s104 = int_to_ptr.vmem [resolvable:$true] %s103
      %109 = dma.hbm_to_vmem [thread:$0]  %s11, 1024, %s104, [#allocation12], 64, 64, 4
    $region49: #{sdae_forward.1} parent=1 // pred_fallthru
      _
    // Predicated region
    $region50: #{sdae_forward.1} parent=1 // pred_check
      _
    $region51: #{sdae_forward.1} parent=1 // pred_check_branch
      %111 = sbr.rel (0) target = $region53
    $region52: #{sdae_forward.1} parent=1 // pred_region
      _
    $region53: #{sdae_forward.1} parent=1 // pred_fallthru
      _
    // Predicated region
    $region54: #{sdae_forward.1} parent=1 // pred_check
      _
    $region55: #{sdae_forward.1} parent=1 // pred_check_branch
      %113 = sbr.rel (0) target = $region57
    $region56: #{sdae_forward.1} parent=1 // pred_region
      %114 = dma.done [#allocation3], 1024
    $region57: #{sdae_forward.1} parent=1 // pred_fallthru
      _
    // Predicated region
    $region58: #{sdae_forward.1} parent=1 // pred_check
      _
    $region59: #{sdae_forward.1} parent=1 // pred_check_branch
      %116 = sbr.rel (0) target = $region61
    $region60: #{sdae_forward.1} parent=1 // pred_region
      %117 = dma.done [#allocation6], 1024
    $region61: #{sdae_forward.1} parent=1 // pred_fallthru
      _
    // Predicated region
    $region62: #{sdae_forward.1} parent=1 // pred_check
      _
    $region63: #{sdae_forward.1} parent=1 // pred_check_branch
      %119 = sbr.rel (0) target = $region65
    $region64: #{sdae_forward.1} parent=1 // pred_region
      %120 = dma.done [#allocation6], 1024
    $region65: #{sdae_forward.1} parent=1 // pred_fallthru
      _
    // Predicated region
    $region66: #{sdae_forward.1} parent=1 // pred_check
      _
    $region67: #{sdae_forward.1} parent=1 // pred_check_branch
      %122 = sbr.rel (0) target = $region69
    $region68: #{sdae_forward.1} parent=1 // pred_region
      %123 = dma.done [#allocation9], 1024
    $region69: #{sdae_forward.1} parent=1 // pred_fallthru
      _
    // Predicated region
    $region70: #{sdae_forward.1} parent=1 // pred_check
      _
    $region71: #{sdae_forward.1} parent=1 // pred_check_branch
      %125 = sbr.rel (0) target = $region73
    $region72: #{sdae_forward.1} parent=1 // pred_region
      %126 = dma.done [#allocation9], 1024
    $region73: #{sdae_forward.1} parent=1 // pred_fallthru
      _
    // Predicated region
    $region74: #{sdae_forward.1} parent=1 // pred_check
      _
    $region75: #{sdae_forward.1} parent=1 // pred_check_branch
      %128 = sbr.rel (0) target = $region77
    $region76: #{sdae_forward.1} parent=1 // pred_region
      %129 = dma.done [#allocation12], 1024
    $region77: #{sdae_forward.1} parent=1 // pred_fallthru
      _
    %v131 = vld [vmem:[%s0] sm:$0xf]
    %v132 = vld [vmem:[%s0 + $0x4] sm:$0xf]
    %v133 = vld [vmem:[#allocation2] sm:$0xf]
    %v134 = vld [vmem:[#allocation2 + $0x4] sm:$0xf]
    %v135 = vld [vmem:[#allocation2 + $0x8] sm:$0xf]
    %v136 = vld [vmem:[#allocation2 + $0xc] sm:$0xf]
    %v137 = vld [vmem:[#allocation2 + $0x10] sm:$0xf]
    %v138 = vld [vmem:[#allocation2 + $0x14] sm:$0xf]
    %v139 = vld [vmem:[#allocation2 + $0x18] sm:$0xf]
    %v140 = vld [vmem:[#allocation2 + $0x1c] sm:$0xf]
    %v141 = vld [vmem:[#allocation2 + $0x20] sm:$0xf]
    %v142 = vld [vmem:[#allocation2 + $0x24] sm:$0xf]
    %v143 = vld [vmem:[#allocation2 + $0x28] sm:$0xf]
    %v144 = vld [vmem:[#allocation2 + $0x2c] sm:$0xf]
    %v145 = vld [vmem:[#allocation2 + $0x30] sm:$0xf]
    %v146 = vld [vmem:[#allocation2 + $0x34] sm:$0xf]
    %v147 = vld [vmem:[#allocation2 + $0x38] sm:$0xf]
    %v148 = vld [vmem:[#allocation2 + $0x3c] sm:$0xf]
    %v149 = vld [vmem:[%s2] sm:$0x1]
    %v151 = vlaneseq
    %v152 = vshrl.u32 %v151, 7
    %v153 = vsub.s32 0, %v152
    %v154 = vrot.slane %v149, %v153
    %v158 = vunpack.c.l.b16 %v131
    %v159 = vunpack.c.l.b16 %v132
    %v160 = vpack.c.b16 %v159, %v158
    %v178 = vunpack.c.l.b16 %v133
    %v179 = vunpack.c.l.b16 %v134
    %v180 = vunpack.c.l.b16 %v135
    %v181 = vunpack.c.l.b16 %v136
    %v182 = vunpack.c.l.b16 %v137
    %v183 = vunpack.c.l.b16 %v138
    %v184 = vunpack.c.l.b16 %v139
    %v185 = vunpack.c.l.b16 %v140
    %v186 = vunpack.c.l.b16 %v141
    %v187 = vunpack.c.l.b16 %v142
    %v188 = vunpack.c.l.b16 %v143
    %v189 = vunpack.c.l.b16 %v144
    %v190 = vunpack.c.l.b16 %v145
    %v191 = vunpack.c.l.b16 %v146
    %v192 = vunpack.c.l.b16 %v147
    %v193 = vunpack.c.l.b16 %v148
    %v194 = vpack.c.b16 %v179, %v178
    %v195 = vpack.c.b16 %v181, %v180
    %v196 = vpack.c.b16 %v183, %v182
    %v197 = vpack.c.b16 %v185, %v184
    %v198 = vpack.c.b16 %v187, %v186
    %v199 = vpack.c.b16 %v189, %v188
    %v200 = vpack.c.b16 %v191, %v190
    %v201 = vpack.c.b16 %v193, %v192
    %210 = vmatprep.subr.bf16.mxu0 0
    %211 = vmatpush1.bf16.msra.mxu0 %v201
    %212 = vmatprep.subr.bf16.mxu0 0
    %213 = vmatpush1.bf16.msra.mxu0 %v200
    %214 = vmatprep.subr.bf16.mxu0 0
    %215 = vmatpush1.bf16.msra.mxu0 %v199
    %216 = vmatprep.subr.bf16.mxu0 0
    %217 = vmatpush1.bf16.msra.mxu0 %v198
    %218 = vmatprep.subr.bf16.mxu0 0
    %219 = vmatpush1.bf16.msra.mxu0 %v197
    %220 = vmatprep.subr.bf16.mxu0 0
    %221 = vmatpush1.bf16.msra.mxu0 %v196
    %222 = vmatprep.subr.bf16.mxu0 0
    %223 = vmatpush1.bf16.msra.mxu0 %v195
    %224 = vmatprep.subr.bf16.mxu0 0
    %225 = vmatpush1.bf16.msra.mxu0 %v194
    %226 = vmatprep.subr.bf16.mxu0 0
    %227 = vmatpush2.bf16.msra.mxu0 0
    %228 = vmatprep.subr.bf16.mxu0 0
    %229 = vmatpush2.bf16.msra.mxu0 0
    %230 = vmatprep.subr.bf16.mxu0 0
    %231 = vmatpush2.bf16.msra.mxu0 0
    %232 = vmatprep.subr.bf16.mxu0 0
    %233 = vmatpush2.bf16.msra.mxu0 0
    %234 = vmatprep.subr.bf16.mxu0 0
    %235 = vmatpush2.bf16.msra.mxu0 0
    %236 = vmatprep.subr.bf16.mxu0 0
    %237 = vmatpush2.bf16.msra.mxu0 0
    %238 = vmatprep.subr.bf16.mxu0 0
    %239 = vmatpush2.bf16.msra.mxu0 0
    %240 = vmatprep.subr.bf16.mxu0 0
    %241 = vmatpush2.bf16.msra.mxu0 0
    %242 = vmatprep.mubr.bf16.mxu0 0
    %243 = vmatmul.mubr.bf16.gmra.mxu0 %v160
    %v244 = vpop.f32.mrf.mxu0
    %v245 = vadd.f32 %v154, %v244
    %v246 = vpop.f32.mrf.mxu0
    %v247 = vpop.f32.mrf.mxu0
    %v248 = vadd.f32 %v154, %v247
    %v249 = vpop.f32.mrf.mxu0
    %250 = vdwg.mxu0
    %v251 = vmax.f32 %v245, 0.0
    %v252 = vmax.f32 %v248, 0.0
    %v253 = vpack.c.bf16 %v252, %v251
    %v254 = vld [vmem:[#allocation5] sm:$0xf]
    %v255 = vld [vmem:[#allocation5 + $0x4] sm:$0xf]
    %v256 = vld [vmem:[#allocation5 + $0x8] sm:$0xf]
    %v257 = vld [vmem:[#allocation5 + $0xc] sm:$0xf]
    %v258 = vld [vmem:[#allocation5 + $0x10] sm:$0xf]
    %v259 = vld [vmem:[#allocation5 + $0x14] sm:$0xf]
    %v260 = vld [vmem:[#allocation5 + $0x18] sm:$0xf]
    %v261 = vld [vmem:[#allocation5 + $0x1c] sm:$0xf]
    %v262 = vld [vmem:[#allocation5 + $0x20] sm:$0xf]
    %v263 = vld [vmem:[#allocation5 + $0x24] sm:$0xf]
    %v264 = vld [vmem:[#allocation5 + $0x28] sm:$0xf]
    %v265 = vld [vmem:[#allocation5 + $0x2c] sm:$0xf]
    %v266 = vld [vmem:[#allocation5 + $0x30] sm:$0xf]
    %v267 = vld [vmem:[#allocation5 + $0x34] sm:$0xf]
    %v268 = vld [vmem:[#allocation5 + $0x38] sm:$0xf]
    %v269 = vld [vmem:[#allocation5 + $0x3c] sm:$0xf]
    %v270 = vld [vmem:[%s4] sm:$0x1]
    %v272 = vlaneseq
    %v273 = vshrl.u32 %v272, 7
    %v274 = vsub.s32 0, %v273
    %v275 = vrot.slane %v270, %v274
    %v293 = vunpack.c.l.b16 %v254
    %v294 = vunpack.c.l.b16 %v255
    %v295 = vunpack.c.l.b16 %v256
    %v296 = vunpack.c.l.b16 %v257
    %v297 = vunpack.c.l.b16 %v258
    %v298 = vunpack.c.l.b16 %v259
    %v299 = vunpack.c.l.b16 %v260
    %v300 = vunpack.c.l.b16 %v261
    %v301 = vunpack.c.l.b16 %v262
    %v302 = vunpack.c.l.b16 %v263
    %v303 = vunpack.c.l.b16 %v264
    %v304 = vunpack.c.l.b16 %v265
    %v305 = vunpack.c.l.b16 %v266
    %v306 = vunpack.c.l.b16 %v267
    %v307 = vunpack.c.l.b16 %v268
    %v308 = vunpack.c.l.b16 %v269
    %v309 = vpack.c.b16 %v294, %v293
    %v310 = vpack.c.b16 %v296, %v295
    %v311 = vpack.c.b16 %v298, %v297
    %v312 = vpack.c.b16 %v300, %v299
    %v313 = vpack.c.b16 %v302, %v301
    %v314 = vpack.c.b16 %v304, %v303
    %v315 = vpack.c.b16 %v306, %v305
    %v316 = vpack.c.b16 %v308, %v307
    %325 = vmatprep.subr.bf16.mxu0 0
    %326 = vmatpush1.bf16.msra.mxu0 %v316
    %327 = vmatprep.subr.bf16.mxu0 0
    %328 = vmatpush1.bf16.msra.mxu0 %v315
    %329 = vmatprep.subr.bf16.mxu0 0
    %330 = vmatpush1.bf16.msra.mxu0 %v314
    %331 = vmatprep.subr.bf16.mxu0 0
    %332 = vmatpush1.bf16.msra.mxu0 %v313
    %333 = vmatprep.subr.bf16.mxu0 0
    %334 = vmatpush1.bf16.msra.mxu0 %v312
    %335 = vmatprep.subr.bf16.mxu0 0
    %336 = vmatpush1.bf16.msra.mxu0 %v311
    %337 = vmatprep.subr.bf16.mxu0 0
    %338 = vmatpush1.bf16.msra.mxu0 %v310
    %339 = vmatprep.subr.bf16.mxu0 0
    %340 = vmatpush1.bf16.msra.mxu0 %v309
    %341 = vmatprep.subr.bf16.mxu0 0
    %342 = vmatpush2.bf16.msra.mxu0 0
    %343 = vmatprep.subr.bf16.mxu0 0
    %344 = vmatpush2.bf16.msra.mxu0 0
    %345 = vmatprep.subr.bf16.mxu0 0
    %346 = vmatpush2.bf16.msra.mxu0 0
    %347 = vmatprep.subr.bf16.mxu0 0
    %348 = vmatpush2.bf16.msra.mxu0 0
    %349 = vmatprep.subr.bf16.mxu0 0
    %350 = vmatpush2.bf16.msra.mxu0 0
    %351 = vmatprep.subr.bf16.mxu0 0
    %352 = vmatpush2.bf16.msra.mxu0 0
    %353 = vmatprep.subr.bf16.mxu0 0
    %354 = vmatpush2.bf16.msra.mxu0 0
    %355 = vmatprep.subr.bf16.mxu0 0
    %356 = vmatpush2.bf16.msra.mxu0 0
    %357 = vmatprep.mubr.bf16.mxu0 0
    %358 = vmatmul.mubr.bf16.gmra.mxu0 %v253
    %v359 = vpop.f32.mrf.mxu0
    %v360 = vadd.f32 %v275, %v359
    %v361 = vpop.f32.mrf.mxu0
    %v362 = vpop.f32.mrf.mxu0
    %v363 = vadd.f32 %v275, %v362
    %v364 = vpop.f32.mrf.mxu0
    %365 = vdwg.mxu0
    %v366 = vmax.f32 %v360, 0.0
    %v367 = vmax.f32 %v363, 0.0
    %v368 = vpack.c.bf16 %v367, %v366
    %v369 = vld [vmem:[#allocation7] sm:$0xf]
    %v370 = vld [vmem:[#allocation7 + $0x4] sm:$0xf]
    %v371 = vld [vmem:[#allocation7 + $0x8] sm:$0xf]
    %v372 = vld [vmem:[#allocation7 + $0xc] sm:$0xf]
    %v373 = vld [vmem:[#allocation7 + $0x10] sm:$0xf]
    %v374 = vld [vmem:[#allocation7 + $0x14] sm:$0xf]
    %v375 = vld [vmem:[#allocation7 + $0x18] sm:$0xf]
    %v376 = vld [vmem:[#allocation7 + $0x1c] sm:$0xf]
    %v377 = vld [vmem:[#allocation7 + $0x20] sm:$0xf]
    %v378 = vld [vmem:[#allocation7 + $0x24] sm:$0xf]
    %v379 = vld [vmem:[#allocation7 + $0x28] sm:$0xf]
    %v380 = vld [vmem:[#allocation7 + $0x2c] sm:$0xf]
    %v381 = vld [vmem:[#allocation7 + $0x30] sm:$0xf]
    %v382 = vld [vmem:[#allocation7 + $0x34] sm:$0xf]
    %v383 = vld [vmem:[#allocation7 + $0x38] sm:$0xf]
    %v384 = vld [vmem:[#allocation7 + $0x3c] sm:$0xf]
    %v385 = vld [vmem:[%s6] sm:$0x1]
    %v387 = vlaneseq
    %v388 = vshrl.u32 %v387, 7
    %v389 = vsub.s32 0, %v388
    %v390 = vrot.slane %v385, %v389
    %v408 = vunpack.c.l.b16 %v369
    %v409 = vunpack.c.l.b16 %v370
    %v410 = vunpack.c.l.b16 %v371
    %v411 = vunpack.c.l.b16 %v372
    %v412 = vunpack.c.l.b16 %v373
    %v413 = vunpack.c.l.b16 %v374
    %v414 = vunpack.c.l.b16 %v375
    %v415 = vunpack.c.l.b16 %v376
    %v416 = vunpack.c.l.b16 %v377
    %v417 = vunpack.c.l.b16 %v378
    %v418 = vunpack.c.l.b16 %v379
    %v419 = vunpack.c.l.b16 %v380
    %v420 = vunpack.c.l.b16 %v381
    %v421 = vunpack.c.l.b16 %v382
    %v422 = vunpack.c.l.b16 %v383
    %v423 = vunpack.c.l.b16 %v384
    %v424 = vpack.c.b16 %v409, %v408
    %v425 = vpack.c.b16 %v411, %v410
    %v426 = vpack.c.b16 %v413, %v412
    %v427 = vpack.c.b16 %v415, %v414
    %v428 = vpack.c.b16 %v417, %v416
    %v429 = vpack.c.b16 %v419, %v418
    %v430 = vpack.c.b16 %v421, %v420
    %v431 = vpack.c.b16 %v423, %v422
    %440 = vmatprep.subr.bf16.mxu0 0
    %441 = vmatpush1.bf16.msra.mxu0 %v431
    %442 = vmatprep.subr.bf16.mxu0 0
    %443 = vmatpush1.bf16.msra.mxu0 %v430
    %444 = vmatprep.subr.bf16.mxu0 0
    %445 = vmatpush1.bf16.msra.mxu0 %v429
    %446 = vmatprep.subr.bf16.mxu0 0
    %447 = vmatpush1.bf16.msra.mxu0 %v428
    %448 = vmatprep.subr.bf16.mxu0 0
    %449 = vmatpush1.bf16.msra.mxu0 %v427
    %450 = vmatprep.subr.bf16.mxu0 0
    %451 = vmatpush1.bf16.msra.mxu0 %v426
    %452 = vmatprep.subr.bf16.mxu0 0
    %453 = vmatpush1.bf16.msra.mxu0 %v425
    %454 = vmatprep.subr.bf16.mxu0 0
    %455 = vmatpush1.bf16.msra.mxu0 %v424
    %456 = vmatprep.subr.bf16.mxu0 0
    %457 = vmatpush2.bf16.msra.mxu0 0
    %458 = vmatprep.subr.bf16.mxu0 0
    %459 = vmatpush2.bf16.msra.mxu0 0
    %460 = vmatprep.subr.bf16.mxu0 0
    %461 = vmatpush2.bf16.msra.mxu0 0
    %462 = vmatprep.subr.bf16.mxu0 0
    %463 = vmatpush2.bf16.msra.mxu0 0
    %464 = vmatprep.subr.bf16.mxu0 0
    %465 = vmatpush2.bf16.msra.mxu0 0
    %466 = vmatprep.subr.bf16.mxu0 0
    %467 = vmatpush2.bf16.msra.mxu0 0
    %468 = vmatprep.subr.bf16.mxu0 0
    %469 = vmatpush2.bf16.msra.mxu0 0
    %470 = vmatprep.subr.bf16.mxu0 0
    %471 = vmatpush2.bf16.msra.mxu0 0
    %472 = vmatprep.mubr.bf16.mxu0 0
    %473 = vmatmul.mubr.bf16.gmra.mxu0 %v368
    %v474 = vpop.f32.mrf.mxu0
    %v475 = vadd.f32 %v390, %v474
    %v476 = vpop.f32.mrf.mxu0
    %v477 = vpop.f32.mrf.mxu0
    %v478 = vadd.f32 %v390, %v477
    %v479 = vpop.f32.mrf.mxu0
    %480 = vdwg.mxu0
    %v481 = vmax.f32 %v475, 0.0
    %v482 = vmax.f32 %v478, 0.0
    %483 = vst [vmem:[#allocation13] sm:$0xff] %v481
    %484 = vst [vmem:[#allocation13 + $0x8] sm:$0xff] %v482
    %v485 = vpack.c.bf16 %v482, %v481
    %v486 = vld [vmem:[#allocation8] sm:$0xf]
    %v487 = vld [vmem:[#allocation8 + $0x4] sm:$0xf]
    %v488 = vld [vmem:[#allocation8 + $0x8] sm:$0xf]
    %v489 = vld [vmem:[#allocation8 + $0xc] sm:$0xf]
    %v490 = vld [vmem:[#allocation8 + $0x10] sm:$0xf]
    %v491 = vld [vmem:[#allocation8 + $0x14] sm:$0xf]
    %v492 = vld [vmem:[#allocation8 + $0x18] sm:$0xf]
    %v493 = vld [vmem:[#allocation8 + $0x1c] sm:$0xf]
    %v494 = vld [vmem:[#allocation8 + $0x20] sm:$0xf]
    %v495 = vld [vmem:[#allocation8 + $0x24] sm:$0xf]
    %v496 = vld [vmem:[#allocation8 + $0x28] sm:$0xf]
    %v497 = vld [vmem:[#allocation8 + $0x2c] sm:$0xf]
    %v498 = vld [vmem:[#allocation8 + $0x30] sm:$0xf]
    %v499 = vld [vmem:[#allocation8 + $0x34] sm:$0xf]
    %v500 = vld [vmem:[#allocation8 + $0x38] sm:$0xf]
    %v501 = vld [vmem:[#allocation8 + $0x3c] sm:$0xf]
    %v502 = vld [vmem:[%s8] sm:$0x1]
    %v504 = vlaneseq
    %v505 = vshrl.u32 %v504, 7
    %v506 = vsub.s32 0, %v505
    %v507 = vrot.slane %v502, %v506
    %v525 = vunpack.c.l.b16 %v486
    %v526 = vunpack.c.l.b16 %v487
    %v527 = vunpack.c.l.b16 %v488
    %v528 = vunpack.c.l.b16 %v489
    %v529 = vunpack.c.l.b16 %v490
    %v530 = vunpack.c.l.b16 %v491
    %v531 = vunpack.c.l.b16 %v492
    %v532 = vunpack.c.l.b16 %v493
    %v533 = vunpack.c.l.b16 %v494
    %v534 = vunpack.c.l.b16 %v495
    %v535 = vunpack.c.l.b16 %v496
    %v536 = vunpack.c.l.b16 %v497
    %v537 = vunpack.c.l.b16 %v498
    %v538 = vunpack.c.l.b16 %v499
    %v539 = vunpack.c.l.b16 %v500
    %v540 = vunpack.c.l.b16 %v501
    %v541 = vpack.c.b16 %v526, %v525
    %v542 = vpack.c.b16 %v528, %v527
    %v543 = vpack.c.b16 %v530, %v529
    %v544 = vpack.c.b16 %v532, %v531
    %v545 = vpack.c.b16 %v534, %v533
    %v546 = vpack.c.b16 %v536, %v535
    %v547 = vpack.c.b16 %v538, %v537
    %v548 = vpack.c.b16 %v540, %v539
    %557 = vmatprep.subr.bf16.mxu0 0
    %558 = vmatpush1.bf16.msra.mxu0 %v548
    %559 = vmatprep.subr.bf16.mxu0 0
    %560 = vmatpush1.bf16.msra.mxu0 %v547
    %561 = vmatprep.subr.bf16.mxu0 0
    %562 = vmatpush1.bf16.msra.mxu0 %v546
    %563 = vmatprep.subr.bf16.mxu0 0
    %564 = vmatpush1.bf16.msra.mxu0 %v545
    %565 = vmatprep.subr.bf16.mxu0 0
    %566 = vmatpush1.bf16.msra.mxu0 %v544
    %567 = vmatprep.subr.bf16.mxu0 0
    %568 = vmatpush1.bf16.msra.mxu0 %v543
    %569 = vmatprep.subr.bf16.mxu0 0
    %570 = vmatpush1.bf16.msra.mxu0 %v542
    %571 = vmatprep.subr.bf16.mxu0 0
    %572 = vmatpush1.bf16.msra.mxu0 %v541
    %573 = vmatprep.subr.bf16.mxu0 0
    %574 = vmatpush2.bf16.msra.mxu0 0
    %575 = vmatprep.subr.bf16.mxu0 0
    %576 = vmatpush2.bf16.msra.mxu0 0
    %577 = vmatprep.subr.bf16.mxu0 0
    %578 = vmatpush2.bf16.msra.mxu0 0
    %579 = vmatprep.subr.bf16.mxu0 0
    %580 = vmatpush2.bf16.msra.mxu0 0
    %581 = vmatprep.subr.bf16.mxu0 0
    %582 = vmatpush2.bf16.msra.mxu0 0
    %583 = vmatprep.subr.bf16.mxu0 0
    %584 = vmatpush2.bf16.msra.mxu0 0
    %585 = vmatprep.subr.bf16.mxu0 0
    %586 = vmatpush2.bf16.msra.mxu0 0
    %587 = vmatprep.subr.bf16.mxu0 0
    %588 = vmatpush2.bf16.msra.mxu0 0
    %589 = vmatprep.mubr.bf16.mxu0 0
    %590 = vmatmul.mubr.bf16.gmra.mxu0 %v485
    %v591 = vpop.f32.mrf.mxu0
    %v592 = vadd.f32 %v507, %v591
    %v593 = vpop.f32.mrf.mxu0
    %v594 = vpop.f32.mrf.mxu0
    %v595 = vadd.f32 %v507, %v594
    %v596 = vpop.f32.mrf.mxu0
    %597 = vdwg.mxu0
    %v598 = vmax.f32 %v592, 0.0
    %v599 = vmax.f32 %v595, 0.0
    %v600 = vpack.c.bf16 %v599, %v598
    %v601 = vld [vmem:[#allocation10] sm:$0xf]
    %v602 = vld [vmem:[#allocation10 + $0x4] sm:$0xf]
    %v603 = vld [vmem:[#allocation10 + $0x8] sm:$0xf]
    %v604 = vld [vmem:[#allocation10 + $0xc] sm:$0xf]
    %v605 = vld [vmem:[#allocation10 + $0x10] sm:$0xf]
    %v606 = vld [vmem:[#allocation10 + $0x14] sm:$0xf]
    %v607 = vld [vmem:[#allocation10 + $0x18] sm:$0xf]
    %v608 = vld [vmem:[#allocation10 + $0x1c] sm:$0xf]
    %v609 = vld [vmem:[#allocation10 + $0x20] sm:$0xf]
    %v610 = vld [vmem:[#allocation10 + $0x24] sm:$0xf]
    %v611 = vld [vmem:[#allocation10 + $0x28] sm:$0xf]
    %v612 = vld [vmem:[#allocation10 + $0x2c] sm:$0xf]
    %v613 = vld [vmem:[#allocation10 + $0x30] sm:$0xf]
    %v614 = vld [vmem:[#allocation10 + $0x34] sm:$0xf]
    %v615 = vld [vmem:[#allocation10 + $0x38] sm:$0xf]
    %v616 = vld [vmem:[#allocation10 + $0x3c] sm:$0xf]
    %v617 = vld [vmem:[%s10] sm:$0x1]
    %v619 = vlaneseq
    %v620 = vshrl.u32 %v619, 7
    %v621 = vsub.s32 0, %v620
    %v622 = vrot.slane %v617, %v621
    %v640 = vunpack.c.l.b16 %v601
    %v641 = vunpack.c.l.b16 %v602
    %v642 = vunpack.c.l.b16 %v603
    %v643 = vunpack.c.l.b16 %v604
    %v644 = vunpack.c.l.b16 %v605
    %v645 = vunpack.c.l.b16 %v606
    %v646 = vunpack.c.l.b16 %v607
    %v647 = vunpack.c.l.b16 %v608
    %v648 = vunpack.c.l.b16 %v609
    %v649 = vunpack.c.l.b16 %v610
    %v650 = vunpack.c.l.b16 %v611
    %v651 = vunpack.c.l.b16 %v612
    %v652 = vunpack.c.l.b16 %v613
    %v653 = vunpack.c.l.b16 %v614
    %v654 = vunpack.c.l.b16 %v615
    %v655 = vunpack.c.l.b16 %v616
    %v656 = vpack.c.b16 %v641, %v640
    %v657 = vpack.c.b16 %v643, %v642
    %v658 = vpack.c.b16 %v645, %v644
    %v659 = vpack.c.b16 %v647, %v646
    %v660 = vpack.c.b16 %v649, %v648
    %v661 = vpack.c.b16 %v651, %v650
    %v662 = vpack.c.b16 %v653, %v652
    %v663 = vpack.c.b16 %v655, %v654
    %672 = vmatprep.subr.bf16.mxu0 0
    %673 = vmatpush1.bf16.msra.mxu0 %v663
    %674 = vmatprep.subr.bf16.mxu0 0
    %675 = vmatpush1.bf16.msra.mxu0 %v662
    %676 = vmatprep.subr.bf16.mxu0 0
    %677 = vmatpush1.bf16.msra.mxu0 %v661
    %678 = vmatprep.subr.bf16.mxu0 0
    %679 = vmatpush1.bf16.msra.mxu0 %v660
    %680 = vmatprep.subr.bf16.mxu0 0
    %681 = vmatpush1.bf16.msra.mxu0 %v659
    %682 = vmatprep.subr.bf16.mxu0 0
    %683 = vmatpush1.bf16.msra.mxu0 %v658
    %684 = vmatprep.subr.bf16.mxu0 0
    %685 = vmatpush1.bf16.msra.mxu0 %v657
    %686 = vmatprep.subr.bf16.mxu0 0
    %687 = vmatpush1.bf16.msra.mxu0 %v656
    %688 = vmatprep.subr.bf16.mxu0 0
    %689 = vmatpush2.bf16.msra.mxu0 0
    %690 = vmatprep.subr.bf16.mxu0 0
    %691 = vmatpush2.bf16.msra.mxu0 0
    %692 = vmatprep.subr.bf16.mxu0 0
    %693 = vmatpush2.bf16.msra.mxu0 0
    %694 = vmatprep.subr.bf16.mxu0 0
    %695 = vmatpush2.bf16.msra.mxu0 0
    %696 = vmatprep.subr.bf16.mxu0 0
    %697 = vmatpush2.bf16.msra.mxu0 0
    %698 = vmatprep.subr.bf16.mxu0 0
    %699 = vmatpush2.bf16.msra.mxu0 0
    %700 = vmatprep.subr.bf16.mxu0 0
    %701 = vmatpush2.bf16.msra.mxu0 0
    %702 = vmatprep.subr.bf16.mxu0 0
    %703 = vmatpush2.bf16.msra.mxu0 0
    %704 = vmatprep.mubr.bf16.mxu0 0
    %705 = vmatmul.mubr.bf16.gmra.mxu0 %v600
    %v706 = vpop.f32.mrf.mxu0
    %v707 = vadd.f32 %v622, %v706
    %v708 = vpop.f32.mrf.mxu0
    %v709 = vpop.f32.mrf.mxu0
    %v710 = vadd.f32 %v622, %v709
    %v711 = vpop.f32.mrf.mxu0
    %712 = vdwg.mxu0
    %v713 = vmax.f32 %v707, 0.0
    %v714 = vmax.f32 %v710, 0.0
    %v715 = vpack.c.bf16 %v714, %v713
    %v716 = vld [vmem:[#allocation11] sm:$0xf]
    %v717 = vld [vmem:[#allocation11 + $0x4] sm:$0xf]
    %v718 = vld [vmem:[#allocation11 + $0x8] sm:$0xf]
    %v719 = vld [vmem:[#allocation11 + $0xc] sm:$0xf]
    %v720 = vld [vmem:[#allocation11 + $0x10] sm:$0xf]
    %v721 = vld [vmem:[#allocation11 + $0x14] sm:$0xf]
    %v722 = vld [vmem:[#allocation11 + $0x18] sm:$0xf]
    %v723 = vld [vmem:[#allocation11 + $0x1c] sm:$0xf]
    %v724 = vld [vmem:[#allocation11 + $0x20] sm:$0xf]
    %v725 = vld [vmem:[#allocation11 + $0x24] sm:$0xf]
    %v726 = vld [vmem:[#allocation11 + $0x28] sm:$0xf]
    %v727 = vld [vmem:[#allocation11 + $0x2c] sm:$0xf]
    %v728 = vld [vmem:[#allocation11 + $0x30] sm:$0xf]
    %v729 = vld [vmem:[#allocation11 + $0x34] sm:$0xf]
    %v730 = vld [vmem:[#allocation11 + $0x38] sm:$0xf]
    %v731 = vld [vmem:[#allocation11 + $0x3c] sm:$0xf]
    %v732 = vld [vmem:[%s12] sm:$0x1]
    %v734 = vlaneseq
    %v735 = vshrl.u32 %v734, 7
    %v736 = vsub.s32 0, %v735
    %v737 = vrot.slane %v732, %v736
    %v755 = vunpack.c.l.b16 %v716
    %v756 = vunpack.c.l.b16 %v717
    %v757 = vunpack.c.l.b16 %v718
    %v758 = vunpack.c.l.b16 %v719
    %v759 = vunpack.c.l.b16 %v720
    %v760 = vunpack.c.l.b16 %v721
    %v761 = vunpack.c.l.b16 %v722
    %v762 = vunpack.c.l.b16 %v723
    %v763 = vunpack.c.l.b16 %v724
    %v764 = vunpack.c.l.b16 %v725
    %v765 = vunpack.c.l.b16 %v726
    %v766 = vunpack.c.l.b16 %v727
    %v767 = vunpack.c.l.b16 %v728
    %v768 = vunpack.c.l.b16 %v729
    %v769 = vunpack.c.l.b16 %v730
    %v770 = vunpack.c.l.b16 %v731
    %v771 = vpack.c.b16 %v756, %v755
    %v772 = vpack.c.b16 %v758, %v757
    %v773 = vpack.c.b16 %v760, %v759
    %v774 = vpack.c.b16 %v762, %v761
    %v775 = vpack.c.b16 %v764, %v763
    %v776 = vpack.c.b16 %v766, %v765
    %v777 = vpack.c.b16 %v768, %v767
    %v778 = vpack.c.b16 %v770, %v769
    %787 = vmatprep.subr.bf16.mxu0 0
    %788 = vmatpush1.bf16.msra.mxu0 %v778
    %789 = vmatprep.subr.bf16.mxu0 0
    %790 = vmatpush1.bf16.msra.mxu0 %v777
    %791 = vmatprep.subr.bf16.mxu0 0
    %792 = vmatpush1.bf16.msra.mxu0 %v776
    %793 = vmatprep.subr.bf16.mxu0 0
    %794 = vmatpush1.bf16.msra.mxu0 %v775
    %795 = vmatprep.subr.bf16.mxu0 0
    %796 = vmatpush1.bf16.msra.mxu0 %v774
    %797 = vmatprep.subr.bf16.mxu0 0
    %798 = vmatpush1.bf16.msra.mxu0 %v773
    %799 = vmatprep.subr.bf16.mxu0 0
    %800 = vmatpush1.bf16.msra.mxu0 %v772
    %801 = vmatprep.subr.bf16.mxu0 0
    %802 = vmatpush1.bf16.msra.mxu0 %v771
    %803 = vmatprep.subr.bf16.mxu0 0
    %804 = vmatpush2.bf16.msra.mxu0 0
    %805 = vmatprep.subr.bf16.mxu0 0
    %806 = vmatpush2.bf16.msra.mxu0 0
    %807 = vmatprep.subr.bf16.mxu0 0
    %808 = vmatpush2.bf16.msra.mxu0 0
    %809 = vmatprep.subr.bf16.mxu0 0
    %810 = vmatpush2.bf16.msra.mxu0 0
    %811 = vmatprep.subr.bf16.mxu0 0
    %812 = vmatpush2.bf16.msra.mxu0 0
    %813 = vmatprep.subr.bf16.mxu0 0
    %814 = vmatpush2.bf16.msra.mxu0 0
    %815 = vmatprep.subr.bf16.mxu0 0
    %816 = vmatpush2.bf16.msra.mxu0 0
    %817 = vmatprep.subr.bf16.mxu0 0
    %818 = vmatpush2.bf16.msra.mxu0 0
    %819 = vmatprep.mubr.bf16.mxu0 0
    %820 = vmatmul.mubr.bf16.gmra.mxu0 %v715
    %v821 = vpop.f32.mrf.mxu0
    %v822 = vadd.f32 %v737, %v821
    %v823 = vpop.f32.mrf.mxu0
    %v824 = vpop.f32.mrf.mxu0
    %v825 = vadd.f32 %v737, %v824
    %v826 = vpop.f32.mrf.mxu0
    %827 = vdwg.mxu0
    %828 = vst [vmem:[#allocation14] sm:$0xff] %v822
    %829 = vst [vmem:[#allocation14 + $0x8] sm:$0xff] %v825
    // Predicated region
    $region78: #{sdae_forward.1} parent=1 // pred_check
      _
    $region79: #{sdae_forward.1} parent=1 // pred_check_branch
      %831 = sbr.rel (0) target = $region81
    $region80: #{sdae_forward.1} parent=1 // pred_region
      %s833 = ssub.s32 256, 256
      %834 = vsyncadd [#allocation4], %s833
      %s835 = sshll.u32 [#allocation13], 4
      %s836 = int_to_ptr.vmem [resolvable:$true] %s835
      %841 = dma.vmem_to_hbm [thread:$0]  %s836, 256, %s13, [#allocation4], 128, 128, 8
    $region81: #{sdae_forward.1} parent=1 // pred_fallthru
      _
    // Predicated region
    $region82: #{sdae_forward.1} parent=1 // pred_check
      _
    $region83: #{sdae_forward.1} parent=1 // pred_check_branch
      %843 = sbr.rel (0) target = $region85
    $region84: #{sdae_forward.1} parent=1 // pred_region
      %s845 = ssub.s32 256, 256
      %846 = vsyncadd [#allocation15], %s845
      %s847 = sshll.u32 [#allocation14], 4
      %s848 = int_to_ptr.vmem [resolvable:$true] %s847
      %853 = dma.vmem_to_hbm [thread:$0]  %s848, 256, %s14, [#allocation15], 128, 128, 8
    $region85: #{sdae_forward.1} parent=1 // pred_fallthru
      _
    // Predicated region
    $region86: #{sdae_forward.1} parent=1 // pred_check
      _
    $region87: #{sdae_forward.1} parent=1 // pred_check_branch
      %855 = sbr.rel (0) target = $region89
    $region88: #{sdae_forward.1} parent=1 // pred_region
      %856 = dma.done [#allocation4], 256
    $region89: #{sdae_forward.1} parent=1 // pred_fallthru
      _
    // Predicated region
    $region90: #{sdae_forward.1} parent=1 // pred_check
      _
    $region91: #{sdae_forward.1} parent=1 // pred_check_branch
      %858 = sbr.rel (0) target = $region93
    $region92: #{sdae_forward.1} parent=1 // pred_region
      %859 = dma.done [#allocation15], 256
    $region93: #{sdae_forward.1} parent=1 // pred_fallthru
      _
    %860 = vsyncpa [#allocation3], 1
    %861 = vsyncpa [#allocation6], 1
    %862 = vsyncpa [#allocation9], 1
    %863 = vsyncpa [#allocation12], 1
    %864 = vsyncpa [#allocation4], 1
    %865 = vsyncpa [#allocation15], 1

</llo_original>
